<compile_context>
chip_gen: v7x
topology: tpu7x:2x2x1
jax: 0.10.0
libtpu: 0.0.40
codegen_flags: <defaults>
</compile_context>

<pallas_src>
from functools import partial

import jax
import jax.numpy as jnp
import numpy as np
from jax import lax
from jax.experimental import pallas as pl
from jax.experimental.pallas import tpu as pltpu

F_PAD = 128               # lane-dense padded feature width (real: 2, 13, 10, 14, 1)
SCALE_COL = F_PAD - 1     # dedicated column holding 1/|edges in this edge's graph|
NUM_W = 4                 # fce_w, nu_wa, eu_we, lw
NUM_B = 8                 # bias stack rows
USE_BF16 = False          # v5e/v7x MXU-operand cast (f32 accumulation); off to keep 1e-3 check


def _round_up(x, m):
    return max(m, ((x + m - 1) // m) * m)


def _dtsp_kernel(ef_ref, idx_col_ref, idx_row_ref, w_ref, wcat_ref, b_ref, out_ref,
                 *, n_pad, g_pad):
    f32 = jnp.float32
    e_pad = ef_ref.shape[0]
    ef = ef_ref[...]                                # (E, F)

    # ---- one-hots built in-kernel from int32 indices (cheap VPU compares) ----
    # Column orientation is kept for the broadcast compares; row orientation for
    # scatter/pool (no in-kernel transposes -> no XLU work).
    idx_c = idx_col_ref[...]                        # (E, 8)  col0=src, col1=dst
    idx_r = idx_row_ref[...]                        # (8, E)  row0=src, row1=edge_batch
    src_col = idx_c[:, 0:1]
    dst_col = idx_c[:, 1:2]
    src_row = idx_r[0:1, :]
    bat_row = idx_r[1:2, :]

    # scatter one-hot (N, E) and mean-pool one-hot (G, E); padded slots carry an
    # out-of-range sentinel so their one-hot columns are exactly zero.
    src_ohT = (lax.broadcasted_iota(jnp.int32, (n_pad, e_pad), 0) == src_row).astype(f32)
    b_ohT = (lax.broadcasted_iota(jnp.int32, (g_pad, e_pad), 0) == bat_row).astype(f32)
    # combined src/dst gather one-hot (E, 2N): lanes [0,N) pick the src-projected
    # row, lanes [N,2N) pick the dst-projected row of the stacked projection.
    iota2 = lax.broadcasted_iota(jnp.int32, (e_pad, 2 * n_pad), 1)
    comb_oh = jnp.logical_or(iota2 == src_col, iota2 == dst_col + n_pad).astype(f32)

    # ---- packed parameters (static slices of the slabs: free views) ----
    fce_w = w_ref[0]
    nu_wa = w_ref[1]
    eu_we = w_ref[2]
    lw = w_ref[3]
    wcat = wcat_ref[...]                            # (F, 2F): [eu_ws | eu_wd]
    b = b_ref[...]
    fce_b = b[0:1, :]
    nu_b = b[1:2, :]                                # includes folded init-node-features term
    eu_b = b[2:3, :]
    lb = b[3:4, :]

    cast = (lambda x: x.astype(jnp.bfloat16)) if USE_BF16 else (lambda x: x)

    # fully_connected_edges: Linear(2 -> 13)
    h_e = jnp.dot(cast(ef), cast(fce_w), preferred_element_type=f32) + fce_b

    # update_node_features: scatter-add incident edge feats -> Linear -> ReLU
    # (constant init-node-features contribution pre-folded into nu_b)
    agg = jnp.dot(cast(src_ohT), cast(h_e), preferred_element_type=f32)          # (N, F)
    h_n = jnp.maximum(jnp.dot(cast(agg), cast(nu_wa), preferred_element_type=f32) + nu_b, 0.0)

    # update_edge_features: 256-wide fused gather + projection
    #   P = h_n @ [eu_ws | eu_wd]  -> (N, 2F)   (K=128, N=256 matmul)
    #   restack P along sublanes   -> (2N, F)   (lane-aligned vreg copies)
    #   gath = comb_oh @ P_stacked -> (E, F) == h_n[src] @ eu_ws + h_n[dst] @ eu_wd
    p = jnp.dot(cast(h_n), cast(wcat), preferred_element_type=f32)
    p_stacked = jnp.concatenate([p[:, :F_PAD], p[:, F_PAD:]], axis=0)
    gath = jnp.dot(cast(comb_oh), cast(p_stacked), preferred_element_type=f32)
    h_e2 = jnp.maximum(
        jnp.dot(cast(h_e), cast(eu_we), preferred_element_type=f32) + gath + eu_b, 0.0)

    # mean-pool BEFORE the logit projection (1/count folded per edge), then
    # Linear(14 -> 1) on the tiny pooled tensor, then sigmoid.
    scaled = h_e2 * ef[:, SCALE_COL:SCALE_COL + 1]                               # (E, F)
    pooled = jnp.dot(cast(b_ohT), cast(scaled), preferred_element_type=f32)      # (G, F)
    out_ref[...] = jax.nn.sigmoid(
        jnp.dot(cast(pooled), cast(lw), preferred_element_type=f32) + lb)        # (G, F)


def _pad2(x, rows, cols):
    x = jnp.asarray(x, jnp.float32)
    out = jnp.zeros((rows, cols), jnp.float32)
    return out.at[: x.shape[0], : x.shape[1]].set(x)


def init_params(key):
    """Deterministic synthetic parameters, shapes as in the PyTorch __init__."""
    ks = jax.random.split(key, 12)
    s = 0.2
    return {
        # init_node_features: Linear(1 -> 2)
        "init_w": s * jax.random.normal(ks[0], (2, 1), jnp.float32),
        "init_b": s * jax.random.normal(ks[1], (2,), jnp.float32),
        # fully_connected_edges: Linear(2 -> 13)
        "fce_w": s * jax.random.normal(ks[2], (2, 13), jnp.float32),
        "fce_b": s * jax.random.normal(ks[3], (13,), jnp.float32),
        # update_node_features: Linear(2+13 -> 10), split by input block
        "nu_wn": s * jax.random.normal(ks[4], (2, 10), jnp.float32),
        "nu_wa": s * jax.random.normal(ks[5], (13, 10), jnp.float32),
        "nu_b": s * jax.random.normal(ks[6], (10,), jnp.float32),
        # update_edge_features: Linear(13+10+10 -> 14), split by input block
        "eu_we": s * jax.random.normal(ks[7], (13, 14), jnp.float32),
        "eu_ws": s * jax.random.normal(ks[8], (10, 14), jnp.float32),
        "eu_wd": s * jax.random.normal(ks[9], (10, 14), jnp.float32),
        "eu_b": s * jax.random.normal(ks[10], (14,), jnp.float32),
        # fully_connected_edges_logit_prob: Linear(14 -> 1)
        "lw": s * jax.random.normal(ks[11], (14, 1), jnp.float32),
        "lb": jnp.zeros((1,), jnp.float32),
    }


def prepare_params(params):
    """One-time packing/padding of parameters into three kernel slabs."""
    # Fold init_node_features(ones(N,1)) -> Linear(nu_wn) into the node bias.
    init_row = params["init_w"][:, 0] + params["init_b"]               # (2,)
    nu_b_eff = init_row @ params["nu_wn"] + params["nu_b"]             # (10,)

    w = jnp.stack([
        _pad2(params["fce_w"], F_PAD, F_PAD),
        _pad2(params["nu_wa"], F_PAD, F_PAD),
        _pad2(params["eu_we"], F_PAD, F_PAD),
        _pad2(params["lw"], F_PAD, F_PAD),
    ])                                                                  # (4,128,128)

    # Pre-concatenated [eu_ws | eu_wd] for the 256-wide node projection.
    wcat = jnp.zeros((F_PAD, 2 * F_PAD), jnp.float32)
    eu_ws, eu_wd = params["eu_ws"], params["eu_wd"]
    wcat = wcat.at[: eu_ws.shape[0], : eu_ws.shape[1]].set(eu_ws)
    wcat = wcat.at[: eu_wd.shape[0], F_PAD:F_PAD + eu_wd.shape[1]].set(eu_wd)

    b = jnp.zeros((NUM_B, F_PAD), jnp.float32)
    b = b.at[0, :13].set(params["fce_b"])
    b = b.at[1, :10].set(nu_b_eff)
    b = b.at[2, :14].set(params["eu_b"])
    b = b.at[3, :1].set(params["lb"])
    return {"w": w, "wcat": wcat, "b": b}


@partial(jax.jit, static_argnums=(3,))
def dtsp_forward_pallas(edge_index, edge_features, batch, num_graphs, packed):
    src = edge_index[0].astype(jnp.int32)
    dst = edge_index[1].astype(jnp.int32)
    E = edge_features.shape[0]
    N = batch.shape[0]

    # Pad only to the next multiple of 8 on sublane-side dims; lane dims stay 128.
    e_pad = _round_up(E, 8)
    n_pad = _round_up(N, 8)
    g_pad = _round_up(num_graphs, 8)
    sent = jnp.int32(2 * n_pad + g_pad)     # out-of-range for every in-kernel one-hot

    edge_batch = batch[src].astype(jnp.int32)

    # per-graph 1/|E_g| folded into a per-edge scale column (mean pool).
    # NOTE: zero-edge graphs yield sigmoid(lb) here (reference would divide by 0).
    counts = jax.ops.segment_sum(jnp.ones((E,), jnp.float32), edge_batch,
                                 num_segments=num_graphs)
    inv_counts = 1.0 / jnp.maximum(counts, 1.0)
    edge_scale = inv_counts[edge_batch]                                 # (E,)

    ef = jnp.zeros((e_pad, F_PAD), jnp.float32)
    ef = ef.at[:E, :2].set(edge_features.astype(jnp.float32))
    ef = ef.at[:E, SCALE_COL].set(edge_scale)

    # int32 indices in both orientations; padded slots get the sentinel so the
    # in-kernel one-hots have all-zero rows/columns there.
    idx_col = jnp.full((e_pad, 8), sent, jnp.int32)
    idx_col = idx_col.at[:E, 0].set(src).at[:E, 1].set(dst)
    idx_row = jnp.full((8, e_pad), sent, jnp.int32)
    idx_row = idx_row.at[0, :E].set(src).at[1, :E].set(edge_batch)

    kernel = partial(_dtsp_kernel, n_pad=n_pad, g_pad=g_pad)
    out = pl.pallas_call(
        kernel,
        grid=(1,),
        in_specs=[
            pl.BlockSpec((e_pad, F_PAD), lambda i: (0, 0)),
            pl.BlockSpec((e_pad, 8), lambda i: (0, 0)),
            pl.BlockSpec((8, e_pad), lambda i: (0, 0)),
            pl.BlockSpec((NUM_W, F_PAD, F_PAD), lambda i: (0, 0, 0)),
            pl.BlockSpec((F_PAD, 2 * F_PAD), lambda i: (0, 0)),
            pl.BlockSpec((NUM_B, F_PAD), lambda i: (0, 0)),
        ],
        out_specs=pl.BlockSpec((g_pad, F_PAD), lambda i: (0, 0)),
        out_shape=jax.ShapeDtypeStruct((g_pad, F_PAD), jnp.float32),
        compiler_params=pltpu.CompilerParams(
            dimension_semantics=("arbitrary",)),
    )(ef, idx_col, idx_row, packed["w"], packed["wcat"], packed["b"])

    # prediction = sigmoid(logits).flatten() -> one value per graph.
    # The [:num_graphs] slice is required: padded graph rows equal sigmoid(lb).
    return out[:num_graphs, 0]


def reference_forward(edge_index, edge_features, batch, num_nodes, num_graphs, params):
    """Pure-JAX reference mirroring the PyTorch forward semantics."""
    src, dst = edge_index[0], edge_index[1]
    E = edge_features.shape[0]
    hp = lax.Precision.HIGHEST
    nf = jnp.broadcast_to(params["init_w"][:, 0] + params["init_b"], (num_nodes, 2))
    he = jnp.dot(edge_features, params["fce_w"], precision=hp) + params["fce_b"]
    agg = jax.ops.segment_sum(he, src, num_segments=num_nodes)
    hn = jax.nn.relu(jnp.dot(nf, params["nu_wn"], precision=hp)
                     + jnp.dot(agg, params["nu_wa"], precision=hp) + params["nu_b"])
    he2 = jax.nn.relu(jnp.dot(he, params["eu_we"], precision=hp)
                      + jnp.dot(hn[src], params["eu_ws"], precision=hp)
                      + jnp.dot(hn[dst], params["eu_wd"], precision=hp) + params["eu_b"])
    logit = jnp.dot(he2, params["lw"], precision=hp) + params["lb"]
    eb = batch[src]
    pooled = jax.ops.segment_sum(logit, eb, num_segments=num_graphs)
    counts = jax.ops.segment_sum(jnp.ones((E, 1), jnp.float32), eb, num_segments=num_graphs)
    return jax.nn.sigmoid(pooled / counts).flatten()


if __name__ == "__main__":
    # Small deterministic graph batch: 2 graphs x 8 nodes, 16 directed edges each.
    num_graphs = 2
    nodes_per_graph = 8
    num_nodes = num_graphs * nodes_per_graph
    edges_per_graph = 16
    num_edges = num_graphs * edges_per_graph

    key = jax.random.PRNGKey(0)
    k_src, k_dst, k_ef, k_par = jax.random.split(key, 4)

    src_local = jax.random.randint(k_src, (num_edges,), 0, nodes_per_graph)
    dst_local = jax.random.randint(k_dst, (num_edges,), 0, nodes_per_graph)
    graph_of_edge = jnp.repeat(jnp.arange(num_graphs, dtype=jnp.int32), edges_per_graph)
    src = src_local + graph_of_edge * nodes_per_graph
    dst = dst_local + graph_of_edge * nodes_per_graph
    edge_index = jnp.stack([src, dst]).astype(jnp.int32)               # (2, E)

    edge_features = jax.random.normal(k_ef, (num_edges, 2), jnp.float32)   # (E, 2)
    node_features = jnp.zeros((num_nodes, 1), jnp.float32)  # only its row-count is used
    batch = jnp.repeat(jnp.arange(num_graphs, dtype=jnp.int32), nodes_per_graph)  # (N,)

    params = init_params(k_par)
    packed = prepare_params(params)            # one-time parameter packing

    pred = dtsp_forward_pallas(edge_index, edge_features, batch, num_graphs, packed)
    pred = jax.block_until_ready(pred)

    ref = reference_forward(edge_index, edge_features, batch, num_nodes, num_graphs, params)
    np.testing.assert_allclose(np.asarray(pred), np.asarray(ref), rtol=1e-3, atol=1e-3)

    print("KERNEL_OK")
</pallas_src>

<mosaic_0001>
module attributes {stable_mosaic.version = 11 : i64} {
  func.func private @main(%arg0: i32) attributes {dimension_semantics = [#tpu.dimension_semantics<core_parallel>], iteration_bounds = array<i64: 2>, tpu.core_type = #tpu.core_type<sc_scalar_subcore>, window_params = []} {
    return
  }
}

module attributes {stable_mosaic.version = 11 : i64} {
  func.func private @main(%arg0: i32) attributes {dimension_semantics = [#tpu.dimension_semantics<core_parallel>], iteration_bounds = array<i64: 2>, tpu.core_type = #tpu.core_type<sc_scalar_subcore>, window_params = []} {
    return
  }
}

module attributes {stable_mosaic.version = 11 : i64} {
  func.func @_dtsp_kernel(%arg0: i32, %arg1: memref<32x128xf32, #tpu.memory_space<vmem>>, %arg2: memref<32x8xi32, #tpu.memory_space<vmem>>, %arg3: memref<8x32xi32, #tpu.memory_space<vmem>>, %arg4: memref<4x128x128xf32, #tpu.memory_space<vmem>>, %arg5: memref<128x256xf32, #tpu.memory_space<vmem>>, %arg6: memref<8x128xf32, #tpu.memory_space<vmem>>, %arg7: memref<8x128xf32, #tpu.memory_space<vmem>>) attributes {dimension_semantics = [#tpu.dimension_semantics<arbitrary>], iteration_bounds = array<i64: 1>, scalar_prefetch = 0 : i64, scratch_operands = 0 : i64, tpu.core_type = #tpu.core_type<tc>, window_params = [{pipeline_mode = #tpu.pipeline_mode<synchronous>, transform_indices = @transform_0, window_bounds = array<i64: 32, 128>}, {pipeline_mode = #tpu.pipeline_mode<synchronous>, transform_indices = @transform_1, window_bounds = array<i64: 32, 8>}, {pipeline_mode = #tpu.pipeline_mode<synchronous>, transform_indices = @transform_2, window_bounds = array<i64: 8, 32>}, {pipeline_mode = #tpu.pipeline_mode<synchronous>, transform_indices = @transform_3, window_bounds = array<i64: 4, 128, 128>}, {pipeline_mode = #tpu.pipeline_mode<synchronous>, transform_indices = @transform_4, window_bounds = array<i64: 128, 256>}, {pipeline_mode = #tpu.pipeline_mode<synchronous>, transform_indices = @transform_5, window_bounds = array<i64: 8, 128>}, {pipeline_mode = #tpu.pipeline_mode<synchronous>, transform_indices = @transform_6, window_bounds = array<i64: 8, 128>}]} {
    %c0 = arith.constant 0 : index
    %c0_0 = arith.constant 0 : index
    %0 = vector.load %arg1[%c0, %c0_0] : memref<32x128xf32, #tpu.memory_space<vmem>>, vector<32x128xf32>
    %c0_1 = arith.constant 0 : index
    %c0_2 = arith.constant 0 : index
    %1 = vector.load %arg2[%c0_1, %c0_2] : memref<32x8xi32, #tpu.memory_space<vmem>>, vector<32x8xi32>
    %c0_3 = arith.constant 0 : index
    %c0_4 = arith.constant 0 : index
    %2 = vector.load %arg3[%c0_3, %c0_4] : memref<8x32xi32, #tpu.memory_space<vmem>>, vector<8x32xi32>
    %3 = vector.extract_strided_slice %1 {offsets = [0, 0], sizes = [32, 1], strides = [1, 1]} : vector<32x8xi32> to vector<32x1xi32>
    %4 = vector.extract_strided_slice %1 {offsets = [0, 1], sizes = [32, 1], strides = [1, 1]} : vector<32x8xi32> to vector<32x1xi32>
    %5 = vector.extract_strided_slice %2 {offsets = [0, 0], sizes = [1, 32], strides = [1, 1]} : vector<8x32xi32> to vector<1x32xi32>
    %6 = vector.extract_strided_slice %2 {offsets = [1, 0], sizes = [1, 32], strides = [1, 1]} : vector<8x32xi32> to vector<1x32xi32>
    %7 = tpu.iota {dimensions = array<i32: 0>} : vector<16x32xi32>
    %8 = vector.broadcast %5 : vector<1x32xi32> to vector<16x32xi32>
    %9 = arith.cmpi eq, %7, %8 : vector<16x32xi32>
    %10 = arith.extui %9 : vector<16x32xi1> to vector<16x32xi32>
    %11 = arith.sitofp %10 : vector<16x32xi32> to vector<16x32xf32>
    %12 = tpu.iota {dimensions = array<i32: 0>} : vector<8x32xi32>
    %13 = vector.broadcast %6 : vector<1x32xi32> to vector<8x32xi32>
    %14 = arith.cmpi eq, %12, %13 : vector<8x32xi32>
    %15 = arith.extui %14 : vector<8x32xi1> to vector<8x32xi32>
    %16 = arith.sitofp %15 : vector<8x32xi32> to vector<8x32xf32>
    %17 = tpu.iota {dimensions = array<i32: 1>} : vector<32x32xi32>
    %18 = vector.broadcast %3 : vector<32x1xi32> to vector<32x32xi32>
    %19 = arith.cmpi eq, %17, %18 : vector<32x32xi32>
    %c16_i32 = arith.constant 16 : i32
    %20 = vector.broadcast %c16_i32 : i32 to vector<32x1xi32>
    %21 = arith.addi %4, %20 : vector<32x1xi32>
    %22 = vector.broadcast %21 : vector<32x1xi32> to vector<32x32xi32>
    %23 = arith.cmpi eq, %17, %22 : vector<32x32xi32>
    %24 = arith.ori %19, %23 : vector<32x32xi1>
    %25 = arith.extui %24 : vector<32x32xi1> to vector<32x32xi32>
    %26 = arith.sitofp %25 : vector<32x32xi32> to vector<32x32xf32>
    %c0_5 = arith.constant 0 : index
    %c0_6 = arith.constant 0 : index
    %c0_7 = arith.constant 0 : index
    %27 = vector.load %arg4[%c0_5, %c0_6, %c0_7] : memref<4x128x128xf32, #tpu.memory_space<vmem>>, vector<1x128x128xf32>
    %28 = vector.shape_cast %27 : vector<1x128x128xf32> to vector<128x128xf32>
    %c1 = arith.constant 1 : index
    %c0_8 = arith.constant 0 : index
    %c0_9 = arith.constant 0 : index
    %29 = vector.load %arg4[%c1, %c0_8, %c0_9] : memref<4x128x128xf32, #tpu.memory_space<vmem>>, vector<1x128x128xf32>
    %30 = vector.shape_cast %29 : vector<1x128x128xf32> to vector<128x128xf32>
    %c2 = arith.constant 2 : index
    %c0_10 = arith.constant 0 : index
    %c0_11 = arith.constant 0 : index
    %31 = vector.load %arg4[%c2, %c0_10, %c0_11] : memref<4x128x128xf32, #tpu.memory_space<vmem>>, vector<1x128x128xf32>
    %32 = vector.shape_cast %31 : vector<1x128x128xf32> to vector<128x128xf32>
    %c3 = arith.constant 3 : index
    %c0_12 = arith.constant 0 : index
    %c0_13 = arith.constant 0 : index
    %33 = vector.load %arg4[%c3, %c0_12, %c0_13] : memref<4x128x128xf32, #tpu.memory_space<vmem>>, vector<1x128x128xf32>
    %34 = vector.shape_cast %33 : vector<1x128x128xf32> to vector<128x128xf32>
    %c0_14 = arith.constant 0 : index
    %c0_15 = arith.constant 0 : index
    %35 = vector.load %arg5[%c0_14, %c0_15] : memref<128x256xf32, #tpu.memory_space<vmem>>, vector<128x256xf32>
    %c0_16 = arith.constant 0 : index
    %c0_17 = arith.constant 0 : index
    %36 = vector.load %arg6[%c0_16, %c0_17] : memref<8x128xf32, #tpu.memory_space<vmem>>, vector<8x128xf32>
    %37 = vector.extract_strided_slice %36 {offsets = [0, 0], sizes = [1, 128], strides = [1, 1]} : vector<8x128xf32> to vector<1x128xf32>
    %38 = vector.extract_strided_slice %36 {offsets = [1, 0], sizes = [1, 128], strides = [1, 1]} : vector<8x128xf32> to vector<1x128xf32>
    %39 = vector.extract_strided_slice %36 {offsets = [2, 0], sizes = [1, 128], strides = [1, 1]} : vector<8x128xf32> to vector<1x128xf32>
    %40 = vector.extract_strided_slice %36 {offsets = [3, 0], sizes = [1, 128], strides = [1, 1]} : vector<8x128xf32> to vector<1x128xf32>
    %cst = arith.constant dense<0.000000e+00> : vector<32x128xf32>
    %41 = tpu.matmul %0, %28, %cst {dimension_numbers = #tpu.dot_dimension_numbers<[1], [0], [0], [1], [0, 0, 1, 1], [], []>} : vector<32x128xf32>, vector<128x128xf32>, vector<32x128xf32> -> vector<32x128xf32>
    %42 = vector.broadcast %37 : vector<1x128xf32> to vector<32x128xf32>
    %43 = arith.addf %41, %42 : vector<32x128xf32>
    %cst_18 = arith.constant dense<0.000000e+00> : vector<16x128xf32>
    %44 = tpu.matmul %11, %43, %cst_18 {dimension_numbers = #tpu.dot_dimension_numbers<[1], [0], [0], [1], [0, 0, 1, 1], [], []>} : vector<16x32xf32>, vector<32x128xf32>, vector<16x128xf32> -> vector<16x128xf32>
    %cst_19 = arith.constant dense<0.000000e+00> : vector<16x128xf32>
    %45 = tpu.matmul %44, %30, %cst_19 {dimension_numbers = #tpu.dot_dimension_numbers<[1], [0], [0], [1], [0, 0, 1, 1], [], []>} : vector<16x128xf32>, vector<128x128xf32>, vector<16x128xf32> -> vector<16x128xf32>
    %46 = vector.broadcast %38 : vector<1x128xf32> to vector<16x128xf32>
    %47 = arith.addf %45, %46 : vector<16x128xf32>
    %cst_20 = arith.constant 0.000000e+00 : f32
    %48 = vector.broadcast %cst_20 : f32 to vector<16x128xf32>
    %49 = arith.maximumf %47, %48 : vector<16x128xf32>
    %cst_21 = arith.constant dense<0.000000e+00> : vector<16x256xf32>
    %50 = tpu.matmul %49, %35, %cst_21 {dimension_numbers = #tpu.dot_dimension_numbers<[1], [0], [0], [1], [0, 0, 1, 1], [], []>} : vector<16x128xf32>, vector<128x256xf32>, vector<16x256xf32> -> vector<16x256xf32>
    %51 = vector.extract_strided_slice %50 {offsets = [0, 0], sizes = [16, 128], strides = [1, 1]} : vector<16x256xf32> to vector<16x128xf32>
    %52 = vector.extract_strided_slice %50 {offsets = [0, 128], sizes = [16, 128], strides = [1, 1]} : vector<16x256xf32> to vector<16x128xf32>
    %53 = tpu.concatenate %51, %52 in 0 : vector<16x128xf32>, vector<16x128xf32> -> vector<32x128xf32>
    %cst_22 = arith.constant dense<0.000000e+00> : vector<32x128xf32>
    %54 = tpu.matmul %26, %53, %cst_22 {dimension_numbers = #tpu.dot_dimension_numbers<[1], [0], [0], [1], [0, 0, 1, 1], [], []>} : vector<32x32xf32>, vector<32x128xf32>, vector<32x128xf32> -> vector<32x128xf32>
    %cst_23 = arith.constant dense<0.000000e+00> : vector<32x128xf32>
    %55 = tpu.matmul %43, %32, %cst_23 {dimension_numbers = #tpu.dot_dimension_numbers<[1], [0], [0], [1], [0, 0, 1, 1], [], []>} : vector<32x128xf32>, vector<128x128xf32>, vector<32x128xf32> -> vector<32x128xf32>
    %56 = arith.addf %55, %54 : vector<32x128xf32>
    %57 = vector.broadcast %39 : vector<1x128xf32> to vector<32x128xf32>
    %58 = arith.addf %56, %57 : vector<32x128xf32>
    %cst_24 = arith.constant 0.000000e+00 : f32
    %59 = vector.broadcast %cst_24 : f32 to vector<32x128xf32>
    %60 = arith.maximumf %58, %59 : vector<32x128xf32>
    %61 = vector.extract_strided_slice %0 {offsets = [0, 127], sizes = [32, 1], strides = [1, 1]} : vector<32x128xf32> to vector<32x1xf32>
    %62 = vector.broadcast %61 : vector<32x1xf32> to vector<32x128xf32>
    %63 = arith.mulf %60, %62 : vector<32x128xf32>
    %cst_25 = arith.constant dense<0.000000e+00> : vector<8x128xf32>
    %64 = tpu.matmul %16, %63, %cst_25 {dimension_numbers = #tpu.dot_dimension_numbers<[1], [0], [0], [1], [0, 0, 1, 1], [], []>} : vector<8x32xf32>, vector<32x128xf32>, vector<8x128xf32> -> vector<8x128xf32>
    %cst_26 = arith.constant dense<0.000000e+00> : vector<8x128xf32>
    %65 = tpu.matmul %64, %34, %cst_26 {dimension_numbers = #tpu.dot_dimension_numbers<[1], [0], [0], [1], [0, 0, 1, 1], [], []>} : vector<8x128xf32>, vector<128x128xf32>, vector<8x128xf32> -> vector<8x128xf32>
    %66 = vector.broadcast %40 : vector<1x128xf32> to vector<8x128xf32>
    %67 = arith.addf %65, %66 : vector<8x128xf32>
    %68 = arith.negf %67 : vector<8x128xf32>
    %69 = math.exp %68 : vector<8x128xf32>
    %cst_27 = arith.constant 1.000000e+00 : f32
    %70 = vector.broadcast %cst_27 : f32 to vector<8x128xf32>
    %71 = arith.addf %70, %69 : vector<8x128xf32>
    %72 = arith.divf %70, %71 : vector<8x128xf32>
    %c0_28 = arith.constant 0 : index
    %c0_29 = arith.constant 0 : index
    %73 = vector.load %arg7[%c0_28, %c0_29] : memref<8x128xf32, #tpu.memory_space<vmem>>, vector<8x128xf32>
    tpu.vector_store %arg7[%c0_28, %c0_29], %72 {strides = array<i32>} : memref<8x128xf32, #tpu.memory_space<vmem>>, vector<8x128xf32>,
    return
  }
  func.func @transform_0(%arg0: i32) -> (i32, i32) {
    %c0_i32 = arith.constant 0 : i32
    %c0_i32_0 = arith.constant 0 : i32
    %c0_i32_1 = arith.constant 0 : i32
    return %c0_i32, %c0_i32_0 : i32, i32
  }
  func.func @transform_1(%arg0: i32) -> (i32, i32) {
    %c0_i32 = arith.constant 0 : i32
    %c0_i32_0 = arith.constant 0 : i32
    %c0_i32_1 = arith.constant 0 : i32
    return %c0_i32, %c0_i32_0 : i32, i32
  }
  func.func @transform_2(%arg0: i32) -> (i32, i32) {
    %c0_i32 = arith.constant 0 : i32
    %c0_i32_0 = arith.constant 0 : i32
    %c0_i32_1 = arith.constant 0 : i32
    return %c0_i32, %c0_i32_0 : i32, i32
  }
  func.func @transform_3(%arg0: i32) -> (i32, i32, i32) {
    %c0_i32 = arith.constant 0 : i32
    %c0_i32_0 = arith.constant 0 : i32
    %c0_i32_1 = arith.constant 0 : i32
    %c0_i32_2 = arith.constant 0 : i32
    return %c0_i32, %c0_i32_0, %c0_i32_1 : i32, i32, i32
  }
  func.func @transform_4(%arg0: i32) -> (i32, i32) {
    %c0_i32 = arith.constant 0 : i32
    %c0_i32_0 = arith.constant 0 : i32
    %c0_i32_1 = arith.constant 0 : i32
    return %c0_i32, %c0_i32_0 : i32, i32
  }
  func.func @transform_5(%arg0: i32) -> (i32, i32) {
    %c0_i32 = arith.constant 0 : i32
    %c0_i32_0 = arith.constant 0 : i32
    %c0_i32_1 = arith.constant 0 : i32
    return %c0_i32, %c0_i32_0 : i32, i32
  }
  func.func @transform_6(%arg0: i32) -> (i32, i32) {
    %c0_i32 = arith.constant 0 : i32
    %c0_i32_0 = arith.constant 0 : i32
    %c0_i32_1 = arith.constant 0 : i32
    return %c0_i32, %c0_i32_0 : i32, i32
  }
}

</mosaic_0001>

<llo_original>
// kernel: dtsp_forward_pallas.1
$region0: #{dtsp_forward_pallas.1}
  #allocation0 [shape = 'u32[]', space=smem, size = 0x4, offset = 0x4, fixed_abs, tag = 'smem constant byte address 0x4 - core index']
  #allocation1 [shape = 'u32[144,128]{1,0:T(1,128)}', space=vmem, size = 0x12000, scoped, tag = 'internal scratch']
  %s0 = inlined_call_operand.vmem [shape: f32[32,128], index: 0, kind: input, shape index: {}]
  %s1 = inlined_call_operand.vmem [shape: s32[32,8], index: 1, kind: input, shape index: {}]
  %s2 = inlined_call_operand.vmem [shape: s32[8,32], index: 2, kind: input, shape index: {}]
  %s3 = inlined_call_operand.vmem [shape: f32[4,128,128], index: 3, kind: input, shape index: {}]
  %s4 = inlined_call_operand.vmem [shape: f32[128,256], index: 4, kind: input, shape index: {}]
  %s5 = inlined_call_operand.vmem [shape: f32[8,128], index: 5, kind: input, shape index: {}]
  %s6 = inlined_call_operand.vmem [shape: f32[8,128], index: 6, kind: output, shape index: {}]
  %s7 = sld [smem:[#allocation0]]
  $region34: #{dtsp_forward_pallas.1} parent=0
    _
  %s9 = ssub.s32 1, %s7
  %s10 = scalar_select 0, %s9, %s7
  // Predicated region
  $region2: #{dtsp_forward_pallas.1} parent=0 // pred_check
    _
  $region3: #{dtsp_forward_pallas.1} parent=0 // pred_check_branch
    %12 = sbr.rel (0) target = $region5
  $region4: #{dtsp_forward_pallas.1} parent=0 // pred_region
    _
  $region5: #{dtsp_forward_pallas.1} parent=0 // pred_fallthru
    _
  // Predicated region
  $region6: #{dtsp_forward_pallas.1} parent=0 // pred_check
    _
  $region7: #{dtsp_forward_pallas.1} parent=0 // pred_check_branch
    %14 = sbr.rel (0) target = $region9
  $region8: #{dtsp_forward_pallas.1} parent=0 // pred_region
    _
  $region9: #{dtsp_forward_pallas.1} parent=0 // pred_fallthru
    _
  // Predicated region
  $region10: #{dtsp_forward_pallas.1} parent=0 // pred_check
    _
  $region11: #{dtsp_forward_pallas.1} parent=0 // pred_check_branch
    %16 = sbr.rel (0) target = $region13
  $region12: #{dtsp_forward_pallas.1} parent=0 // pred_region
    _
  $region13: #{dtsp_forward_pallas.1} parent=0 // pred_fallthru
    _
  // Predicated region
  $region14: #{dtsp_forward_pallas.1} parent=0 // pred_check
    _
  $region15: #{dtsp_forward_pallas.1} parent=0 // pred_check_branch
    %18 = sbr.rel (0) target = $region17
  $region16: #{dtsp_forward_pallas.1} parent=0 // pred_region
    _
  $region17: #{dtsp_forward_pallas.1} parent=0 // pred_fallthru
    _
  // Predicated region
  $region18: #{dtsp_forward_pallas.1} parent=0 // pred_check
    _
  $region19: #{dtsp_forward_pallas.1} parent=0 // pred_check_branch
    %20 = sbr.rel (0) target = $region21
  $region20: #{dtsp_forward_pallas.1} parent=0 // pred_region
    _
  $region21: #{dtsp_forward_pallas.1} parent=0 // pred_fallthru
    _
  // Predicated region
  $region22: #{dtsp_forward_pallas.1} parent=0 // pred_check
    _
  $region23: #{dtsp_forward_pallas.1} parent=0 // pred_check_branch
    %22 = sbr.rel (0) target = $region25
  $region24: #{dtsp_forward_pallas.1} parent=0 // pred_region
    _
  $region25: #{dtsp_forward_pallas.1} parent=0 // pred_fallthru
    _
  %v23 = vld [vmem:[%s0] sm:$0xff]
  %v24 = vld [vmem:[%s0 + $0x8] sm:$0xff]
  %v25 = vld [vmem:[%s0 + $0x10] sm:$0xff]
  %v26 = vld [vmem:[%s0 + $0x18] sm:$0xff]
  %v27 = vld [vmem:[%s1] sm:$0xff]
  %v28 = vld [vmem:[%s1 + $0x8] sm:$0xff]
  %v29 = vld [vmem:[%s1 + $0x10] sm:$0xff]
  %v30 = vld [vmem:[%s1 + $0x18] sm:$0xff]
  %v31 = vld [vmem:[%s2] sm:$0xff]
  %v32 = vlaneseq
  %v33 = vshrl.u32 %v32, 7
  %v34 = vadd.s32 %v33, 8
  %v35 = vlaneseq
  %v36 = vshrl.u32 %v35, 7
  %v37 = vsub.s32 0, %v36
  %v38 = vrot.slane %v31, %v37
  %vm39 = vcmp.eq.s32.totalorder %v33, %v38
  %vm40 = vcmp.eq.s32.totalorder %v34, %v38
  %v41 = vsel %vm39, 1, 0
  %v42 = vsel %vm40, 1, 0
  %v43 = vcvt.s32.f32 %v41
  %v44 = vcvt.s32.f32 %v42
  %v45 = vlaneseq
  %v46 = vshrl.u32 %v45, 7
  %v47 = vsub.s32 1, %v46
  %v48 = vrot.slane %v31, %v47
  %vm49 = vcmp.eq.s32.totalorder %v33, %v48
  %v50 = vsel %vm49, 1, 0
  %v51 = vcvt.s32.f32 %v50
  %v52 = vlaneseq
  %v53 = vand.u32 %v52, 127
  %54 = vset.pattern.permute.xlu0 0
  %55 = vperm.xlu0 %54, %v27
  %v56 = vpop.permute.xlu0 %55
  %57 = vset.pattern.permute.xlu0 0
  %58 = vperm.xlu0 %57, %v28
  %v59 = vpop.permute.xlu0 %58
  %60 = vset.pattern.permute.xlu0 0
  %61 = vperm.xlu0 %60, %v29
  %v62 = vpop.permute.xlu0 %61
  %63 = vset.pattern.permute.xlu0 0
  %64 = vperm.xlu0 %63, %v30
  %v65 = vpop.permute.xlu0 %64
  %vm66 = vcmp.eq.s32.totalorder %v53, %v56
  %vm67 = vcmp.eq.s32.totalorder %v53, %v59
  %vm68 = vcmp.eq.s32.totalorder %v53, %v62
  %vm69 = vcmp.eq.s32.totalorder %v53, %v65
  %v70 = vadd.s32 %v27, 16
  %v71 = vadd.s32 %v28, 16
  %v72 = vadd.s32 %v29, 16
  %v73 = vadd.s32 %v30, 16
  %74 = vset.pattern.permute.xlu0 1
  %75 = vperm.xlu0 %74, %v70
  %v76 = vpop.permute.xlu0 %75
  %77 = vset.pattern.permute.xlu0 1
  %78 = vperm.xlu0 %77, %v71
  %v79 = vpop.permute.xlu0 %78
  %80 = vset.pattern.permute.xlu0 1
  %81 = vperm.xlu0 %80, %v72
  %v82 = vpop.permute.xlu0 %81
  %83 = vset.pattern.permute.xlu0 1
  %84 = vperm.xlu0 %83, %v73
  %v85 = vpop.permute.xlu0 %84
  %vm86 = vcmp.eq.s32.totalorder %v53, %v76
  %vm87 = vcmp.eq.s32.totalorder %v53, %v79
  %vm88 = vcmp.eq.s32.totalorder %v53, %v82
  %vm89 = vcmp.eq.s32.totalorder %v53, %v85
  %vm90 = vmor %vm66, %vm86
  %vm91 = vmor %vm67, %vm87
  %vm92 = vmor %vm68, %vm88
  %vm93 = vmor %vm69, %vm89
  %v94 = vsel %vm90, 1, 0
  %v95 = vsel %vm91, 1, 0
  %v96 = vsel %vm92, 1, 0
  %v97 = vsel %vm93, 1, 0
  %v98 = vcvt.s32.f32 %v94
  %v99 = vcvt.s32.f32 %v95
  %v100 = vcvt.s32.f32 %v96
  %v101 = vcvt.s32.f32 %v97
  %v102 = vld [vmem:[%s3] sm:$0xff]
  %v103 = vld [vmem:[%s3 + $0x8] sm:$0xff]
  %v104 = vld [vmem:[%s3 + $0x10] sm:$0xff]
  %v105 = vld [vmem:[%s3 + $0x18] sm:$0xff]
  %v106 = vld [vmem:[%s3 + $0x20] sm:$0xff]
  %v107 = vld [vmem:[%s3 + $0x28] sm:$0xff]
  %v108 = vld [vmem:[%s3 + $0x30] sm:$0xff]
  %v109 = vld [vmem:[%s3 + $0x38] sm:$0xff]
  %v110 = vld [vmem:[%s3 + $0x40] sm:$0xff]
  %v111 = vld [vmem:[%s3 + $0x48] sm:$0xff]
  %v112 = vld [vmem:[%s3 + $0x50] sm:$0xff]
  %v113 = vld [vmem:[%s3 + $0x58] sm:$0xff]
  %v114 = vld [vmem:[%s3 + $0x60] sm:$0xff]
  %v115 = vld [vmem:[%s3 + $0x68] sm:$0xff]
  %v116 = vld [vmem:[%s3 + $0x70] sm:$0xff]
  %v117 = vld [vmem:[%s3 + $0x78] sm:$0xff]
  %s118 = scalar_lea.vmem %s3, 128
  %v119 = vld [vmem:[%s118] sm:$0xff]
  %v120 = vld [vmem:[%s118 + $0x8] sm:$0xff]
  %v121 = vld [vmem:[%s118 + $0x10] sm:$0xff]
  %v122 = vld [vmem:[%s118 + $0x18] sm:$0xff]
  %v123 = vld [vmem:[%s118 + $0x20] sm:$0xff]
  %v124 = vld [vmem:[%s118 + $0x28] sm:$0xff]
  %v125 = vld [vmem:[%s118 + $0x30] sm:$0xff]
  %v126 = vld [vmem:[%s118 + $0x38] sm:$0xff]
  %v127 = vld [vmem:[%s118 + $0x40] sm:$0xff]
  %v128 = vld [vmem:[%s118 + $0x48] sm:$0xff]
  %v129 = vld [vmem:[%s118 + $0x50] sm:$0xff]
  %v130 = vld [vmem:[%s118 + $0x58] sm:$0xff]
  %v131 = vld [vmem:[%s118 + $0x60] sm:$0xff]
  %v132 = vld [vmem:[%s118 + $0x68] sm:$0xff]
  %v133 = vld [vmem:[%s118 + $0x70] sm:$0xff]
  %v134 = vld [vmem:[%s118 + $0x78] sm:$0xff]
  %s135 = scalar_lea.vmem %s3, 256
  %v136 = vld [vmem:[%s135] sm:$0xff]
  %v137 = vld [vmem:[%s135 + $0x8] sm:$0xff]
  %v138 = vld [vmem:[%s135 + $0x10] sm:$0xff]
  %v139 = vld [vmem:[%s135 + $0x18] sm:$0xff]
  %v140 = vld [vmem:[%s135 + $0x20] sm:$0xff]
  %v141 = vld [vmem:[%s135 + $0x28] sm:$0xff]
  %v142 = vld [vmem:[%s135 + $0x30] sm:$0xff]
  %v143 = vld [vmem:[%s135 + $0x38] sm:$0xff]
  %v144 = vld [vmem:[%s135 + $0x40] sm:$0xff]
  %v145 = vld [vmem:[%s135 + $0x48] sm:$0xff]
  %v146 = vld [vmem:[%s135 + $0x50] sm:$0xff]
  %v147 = vld [vmem:[%s135 + $0x58] sm:$0xff]
  %v148 = vld [vmem:[%s135 + $0x60] sm:$0xff]
  %v149 = vld [vmem:[%s135 + $0x68] sm:$0xff]
  %v150 = vld [vmem:[%s135 + $0x70] sm:$0xff]
  %v151 = vld [vmem:[%s135 + $0x78] sm:$0xff]
  %s152 = scalar_lea.vmem %s3, 384
  %v153 = vld [vmem:[%s152] sm:$0xff]
  %v154 = vld [vmem:[%s152 + $0x8] sm:$0xff]
  %v155 = vld [vmem:[%s152 + $0x10] sm:$0xff]
  %v156 = vld [vmem:[%s152 + $0x18] sm:$0xff]
  %v157 = vld [vmem:[%s152 + $0x20] sm:$0xff]
  %v158 = vld [vmem:[%s152 + $0x28] sm:$0xff]
  %v159 = vld [vmem:[%s152 + $0x30] sm:$0xff]
  %v160 = vld [vmem:[%s152 + $0x38] sm:$0xff]
  %v161 = vld [vmem:[%s152 + $0x40] sm:$0xff]
  %v162 = vld [vmem:[%s152 + $0x48] sm:$0xff]
  %v163 = vld [vmem:[%s152 + $0x50] sm:$0xff]
  %v164 = vld [vmem:[%s152 + $0x58] sm:$0xff]
  %v165 = vld [vmem:[%s152 + $0x60] sm:$0xff]
  %v166 = vld [vmem:[%s152 + $0x68] sm:$0xff]
  %v167 = vld [vmem:[%s152 + $0x70] sm:$0xff]
  %v168 = vld [vmem:[%s152 + $0x78] sm:$0xff]
  %v169 = vld [vmem:[%s4] sm:$0xff]
  %v170 = vld [vmem:[%s4 + $0x8] sm:$0xff]
  %v171 = vld [vmem:[%s4 + $0x10] sm:$0xff]
  %v172 = vld [vmem:[%s4 + $0x18] sm:$0xff]
  %v173 = vld [vmem:[%s4 + $0x20] sm:$0xff]
  %v174 = vld [vmem:[%s4 + $0x28] sm:$0xff]
  %v175 = vld [vmem:[%s4 + $0x30] sm:$0xff]
  %v176 = vld [vmem:[%s4 + $0x38] sm:$0xff]
  %v177 = vld [vmem:[%s4 + $0x40] sm:$0xff]
  %v178 = vld [vmem:[%s4 + $0x48] sm:$0xff]
  %v179 = vld [vmem:[%s4 + $0x50] sm:$0xff]
  %v180 = vld [vmem:[%s4 + $0x58] sm:$0xff]
  %v181 = vld [vmem:[%s4 + $0x60] sm:$0xff]
  %v182 = vld [vmem:[%s4 + $0x68] sm:$0xff]
  %v183 = vld [vmem:[%s4 + $0x70] sm:$0xff]
  %v184 = vld [vmem:[%s4 + $0x78] sm:$0xff]
  %v185 = vld [vmem:[%s4 + $0x80] sm:$0xff]
  %v186 = vld [vmem:[%s4 + $0x88] sm:$0xff]
  %v187 = vld [vmem:[%s4 + $0x90] sm:$0xff]
  %v188 = vld [vmem:[%s4 + $0x98] sm:$0xff]
  %v189 = vld [vmem:[%s4 + $0xa0] sm:$0xff]
  %v190 = vld [vmem:[%s4 + $0xa8] sm:$0xff]
  %v191 = vld [vmem:[%s4 + $0xb0] sm:$0xff]
  %v192 = vld [vmem:[%s4 + $0xb8] sm:$0xff]
  %v193 = vld [vmem:[%s4 + $0xc0] sm:$0xff]
  %v194 = vld [vmem:[%s4 + $0xc8] sm:$0xff]
  %v195 = vld [vmem:[%s4 + $0xd0] sm:$0xff]
  %v196 = vld [vmem:[%s4 + $0xd8] sm:$0xff]
  %v197 = vld [vmem:[%s4 + $0xe0] sm:$0xff]
  %v198 = vld [vmem:[%s4 + $0xe8] sm:$0xff]
  %v199 = vld [vmem:[%s4 + $0xf0] sm:$0xff]
  %v200 = vld [vmem:[%s4 + $0xf8] sm:$0xff]
  %v201 = vld [vmem:[%s5] sm:$0xff]
  %v202 = vlaneseq
  %v203 = vshrl.u32 %v202, 7
  %v204 = vsub.s32 0, %v203
  %v205 = vrot.slane %v201, %v204
  %206 = vmatprep.subr.mxu0 0.0
  %207 = vmatpush1.msra.mxu0 %v102
  %208 = vmatprep.subr.mxu0 0.0
  %209 = vmatpush1.msra.mxu0 %v103
  %210 = vmatprep.subr.mxu0 0.0
  %211 = vmatpush1.msra.mxu0 %v104
  %212 = vmatprep.subr.mxu0 0.0
  %213 = vmatpush1.msra.mxu0 %v105
  %214 = vmatprep.subr.mxu0 0.0
  %215 = vmatpush1.msra.mxu0 %v106
  %216 = vmatprep.subr.mxu0 0.0
  %217 = vmatpush1.msra.mxu0 %v107
  %218 = vmatprep.subr.mxu0 0.0
  %219 = vmatpush1.msra.mxu0 %v108
  %220 = vmatprep.subr.mxu0 0.0
  %221 = vmatpush1.msra.mxu0 %v109
  %222 = vmatprep.subr.mxu0 0.0
  %223 = vmatpush1.msra.mxu0 %v110
  %224 = vmatprep.subr.mxu0 0.0
  %225 = vmatpush1.msra.mxu0 %v111
  %226 = vmatprep.subr.mxu0 0.0
  %227 = vmatpush1.msra.mxu0 %v112
  %228 = vmatprep.subr.mxu0 0.0
  %229 = vmatpush1.msra.mxu0 %v113
  %230 = vmatprep.subr.mxu0 0.0
  %231 = vmatpush1.msra.mxu0 %v114
  %232 = vmatprep.subr.mxu0 0.0
  %233 = vmatpush1.msra.mxu0 %v115
  %234 = vmatprep.subr.mxu0 0.0
  %235 = vmatpush1.msra.mxu0 %v116
  %236 = vmatprep.subr.mxu0 0.0
  %237 = vmatpush1.msra.mxu0 %v117
  %238 = vmatprep.subr.mxu0 0.0
  %239 = vmatpush1.msra.mxu0 0.0
  %240 = vmatprep.subr.mxu0 0.0
  %241 = vmatpush1.msra.mxu0 0.0
  %242 = vmatprep.subr.mxu0 0.0
  %243 = vmatpush1.msra.mxu0 0.0
  %244 = vmatprep.subr.mxu0 0.0
  %245 = vmatpush1.msra.mxu0 0.0
  %246 = vmatprep.subr.mxu0 0.0
  %247 = vmatpush1.msra.mxu0 0.0
  %248 = vmatprep.subr.mxu0 0.0
  %249 = vmatpush1.msra.mxu0 0.0
  %250 = vmatprep.subr.mxu0 0.0
  %251 = vmatpush1.msra.mxu0 0.0
  %252 = vmatprep.subr.mxu0 0.0
  %253 = vmatpush1.msra.mxu0 0.0
  %254 = vmatprep.subr.mxu0 0.0
  %255 = vmatpush1.msra.mxu0 0.0
  %256 = vmatprep.subr.mxu0 0.0
  %257 = vmatpush1.msra.mxu0 0.0
  %258 = vmatprep.subr.mxu0 0.0
  %259 = vmatpush1.msra.mxu0 0.0
  %260 = vmatprep.subr.mxu0 0.0
  %261 = vmatpush1.msra.mxu0 0.0
  %262 = vmatprep.subr.mxu0 0.0
  %263 = vmatpush1.msra.mxu0 0.0
  %264 = vmatprep.subr.mxu0 0.0
  %265 = vmatpush1.msra.mxu0 0.0
  %266 = vmatprep.subr.mxu0 0.0
  %267 = vmatpush1.msra.mxu0 0.0
  %268 = vmatprep.subr.mxu0 0.0
  %269 = vmatpush1.msra.mxu0 0.0
  %270 = vmatprep.mubr.f32.mxu0 0.0
  %271 = vmatmul.mubr.f32.gmra.mrb[0].mxu0 %v23
  %v272 = vpop.f32.mrb[0].mxu0
  %v273 = vadd.f32 %v205, %v272
  %v274 = vpop.f32.mrb[0].mxu0
  %275 = vmatprep.mubr.f32.mxu0 0.0
  %276 = vmatmul.mubr.f32.gmra.mrb[0].mxu0 %v24
  %v277 = vpop.f32.mrb[0].mxu0
  %v278 = vadd.f32 %v205, %v277
  %v279 = vpop.f32.mrb[0].mxu0
  %280 = vmatprep.mubr.f32.mxu0 0.0
  %281 = vmatmul.mubr.f32.gmra.mrb[0].mxu0 %v25
  %v282 = vpop.f32.mrb[0].mxu0
  %v283 = vadd.f32 %v205, %v282
  %v284 = vpop.f32.mrb[0].mxu0
  %285 = vmatprep.mubr.f32.mxu0 0.0
  %286 = vmatmul.mubr.f32.gmra.mrb[0].mxu0 %v26
  %v287 = vpop.f32.mrb[0].mxu0
  %v288 = vadd.f32 %v205, %v287
  %v289 = vpop.f32.mrb[0].mxu0
  %290 = vdwg.mxu0
  %vm291 = vcmask 261120
  %v293 = vsel %vm291, %v43, 0
  %v296 = vsel %vm291, %v44, 0
  %298 = vmatprep.subr.mxu0 0.0
  %299 = vmatpush1.msra.mxu0 %v273
  %300 = vmatprep.subr.mxu0 0.0
  %301 = vmatpush1.msra.mxu0 %v278
  %302 = vmatprep.subr.mxu0 0.0
  %303 = vmatpush1.msra.mxu0 %v283
  %304 = vmatprep.subr.mxu0 0.0
  %305 = vmatpush1.msra.mxu0 %v288
  %306 = vmatprep.subr.mxu0 0.0
  %307 = vmatpush1.msra.mxu0 0.0
  %308 = vmatprep.subr.mxu0 0.0
  %309 = vmatpush1.msra.mxu0 0.0
  %310 = vmatprep.subr.mxu0 0.0
  %311 = vmatpush1.msra.mxu0 0.0
  %312 = vmatprep.subr.mxu0 0.0
  %313 = vmatpush1.msra.mxu0 0.0
  %314 = vmatprep.subr.mxu0 0.0
  %315 = vmatpush1.msra.mxu0 0.0
  %316 = vmatprep.subr.mxu0 0.0
  %317 = vmatpush1.msra.mxu0 0.0
  %318 = vmatprep.subr.mxu0 0.0
  %319 = vmatpush1.msra.mxu0 0.0
  %320 = vmatprep.subr.mxu0 0.0
  %321 = vmatpush1.msra.mxu0 0.0
  %322 = vmatprep.subr.mxu0 0.0
  %323 = vmatpush1.msra.mxu0 0.0
  %324 = vmatprep.subr.mxu0 0.0
  %325 = vmatpush1.msra.mxu0 0.0
  %326 = vmatprep.subr.mxu0 0.0
  %327 = vmatpush1.msra.mxu0 0.0
  %328 = vmatprep.subr.mxu0 0.0
  %329 = vmatpush1.msra.mxu0 0.0
  %330 = vmatprep.subr.mxu0 0.0
  %331 = vmatpush1.msra.mxu0 0.0
  %332 = vmatprep.subr.mxu0 0.0
  %333 = vmatpush1.msra.mxu0 0.0
  %334 = vmatprep.subr.mxu0 0.0
  %335 = vmatpush1.msra.mxu0 0.0
  %336 = vmatprep.subr.mxu0 0.0
  %337 = vmatpush1.msra.mxu0 0.0
  %338 = vmatprep.subr.mxu0 0.0
  %339 = vmatpush1.msra.mxu0 0.0
  %340 = vmatprep.subr.mxu0 0.0
  %341 = vmatpush1.msra.mxu0 0.0
  %342 = vmatprep.subr.mxu0 0.0
  %343 = vmatpush1.msra.mxu0 0.0
  %344 = vmatprep.subr.mxu0 0.0
  %345 = vmatpush1.msra.mxu0 0.0
  %346 = vmatprep.subr.mxu0 0.0
  %347 = vmatpush1.msra.mxu0 0.0
  %348 = vmatprep.subr.mxu0 0.0
  %349 = vmatpush1.msra.mxu0 0.0
  %350 = vmatprep.subr.mxu0 0.0
  %351 = vmatpush1.msra.mxu0 0.0
  %352 = vmatprep.subr.mxu0 0.0
  %353 = vmatpush1.msra.mxu0 0.0
  %354 = vmatprep.subr.mxu0 0.0
  %355 = vmatpush1.msra.mxu0 0.0
  %356 = vmatprep.subr.mxu0 0.0
  %357 = vmatpush1.msra.mxu0 0.0
  %358 = vmatprep.subr.mxu0 0.0
  %359 = vmatpush1.msra.mxu0 0.0
  %360 = vmatprep.subr.mxu0 0.0
  %361 = vmatpush1.msra.mxu0 0.0
  %362 = vmatprep.mubr.f32.mxu0 0.0
  %363 = vmatmul.mubr.f32.gmra.mrb[0].mxu0 %v293
  %v364 = vpop.f32.mrb[0].mxu0
  %v365 = vadd.f32 0.0, %v364
  %v366 = vpop.f32.mrb[0].mxu0
  %367 = vmatprep.mubr.f32.mxu0 0.0
  %368 = vmatmul.mubr.f32.gmra.mrb[0].mxu0 %v296
  %v369 = vpop.f32.mrb[0].mxu0
  %v370 = vadd.f32 0.0, %v369
  %v371 = vpop.f32.mrb[0].mxu0
  %372 = vdwg.mxu0
  %v373 = vlaneseq
  %v374 = vshrl.u32 %v373, 7
  %v375 = vsub.s32 1, %v374
  %v376 = vrot.slane %v201, %v375
  %377 = vmatprep.subr.mxu0 0.0
  %378 = vmatpush1.msra.mxu0 %v119
  %379 = vmatprep.subr.mxu0 0.0
  %380 = vmatpush1.msra.mxu0 %v120
  %381 = vmatprep.subr.mxu0 0.0
  %382 = vmatpush1.msra.mxu0 %v121
  %383 = vmatprep.subr.mxu0 0.0
  %384 = vmatpush1.msra.mxu0 %v122
  %385 = vmatprep.subr.mxu0 0.0
  %386 = vmatpush1.msra.mxu0 %v123
  %387 = vmatprep.subr.mxu0 0.0
  %388 = vmatpush1.msra.mxu0 %v124
  %389 = vmatprep.subr.mxu0 0.0
  %390 = vmatpush1.msra.mxu0 %v125
  %391 = vmatprep.subr.mxu0 0.0
  %392 = vmatpush1.msra.mxu0 %v126
  %393 = vmatprep.subr.mxu0 0.0
  %394 = vmatpush1.msra.mxu0 %v127
  %395 = vmatprep.subr.mxu0 0.0
  %396 = vmatpush1.msra.mxu0 %v128
  %397 = vmatprep.subr.mxu0 0.0
  %398 = vmatpush1.msra.mxu0 %v129
  %399 = vmatprep.subr.mxu0 0.0
  %400 = vmatpush1.msra.mxu0 %v130
  %401 = vmatprep.subr.mxu0 0.0
  %402 = vmatpush1.msra.mxu0 %v131
  %403 = vmatprep.subr.mxu0 0.0
  %404 = vmatpush1.msra.mxu0 %v132
  %405 = vmatprep.subr.mxu0 0.0
  %406 = vmatpush1.msra.mxu0 %v133
  %407 = vmatprep.subr.mxu0 0.0
  %408 = vmatpush1.msra.mxu0 %v134
  %409 = vmatprep.subr.mxu0 0.0
  %410 = vmatpush1.msra.mxu0 0.0
  %411 = vmatprep.subr.mxu0 0.0
  %412 = vmatpush1.msra.mxu0 0.0
  %413 = vmatprep.subr.mxu0 0.0
  %414 = vmatpush1.msra.mxu0 0.0
  %415 = vmatprep.subr.mxu0 0.0
  %416 = vmatpush1.msra.mxu0 0.0
  %417 = vmatprep.subr.mxu0 0.0
  %418 = vmatpush1.msra.mxu0 0.0
  %419 = vmatprep.subr.mxu0 0.0
  %420 = vmatpush1.msra.mxu0 0.0
  %421 = vmatprep.subr.mxu0 0.0
  %422 = vmatpush1.msra.mxu0 0.0
  %423 = vmatprep.subr.mxu0 0.0
  %424 = vmatpush1.msra.mxu0 0.0
  %425 = vmatprep.subr.mxu0 0.0
  %426 = vmatpush1.msra.mxu0 0.0
  %427 = vmatprep.subr.mxu0 0.0
  %428 = vmatpush1.msra.mxu0 0.0
  %429 = vmatprep.subr.mxu0 0.0
  %430 = vmatpush1.msra.mxu0 0.0
  %431 = vmatprep.subr.mxu0 0.0
  %432 = vmatpush1.msra.mxu0 0.0
  %433 = vmatprep.subr.mxu0 0.0
  %434 = vmatpush1.msra.mxu0 0.0
  %435 = vmatprep.subr.mxu0 0.0
  %436 = vmatpush1.msra.mxu0 0.0
  %437 = vmatprep.subr.mxu0 0.0
  %438 = vmatpush1.msra.mxu0 0.0
  %439 = vmatprep.subr.mxu0 0.0
  %440 = vmatpush1.msra.mxu0 0.0
  %441 = vmatprep.mubr.f32.mxu0 0.0
  %442 = vmatmul.mubr.f32.gmra.mrb[0].mxu0 %v365
  %v443 = vpop.f32.mrb[0].mxu0
  %v444 = vadd.f32 %v376, %v443
  %v445 = vpop.f32.mrb[0].mxu0
  %446 = vmatprep.mubr.f32.mxu0 0.0
  %447 = vmatmul.mubr.f32.gmra.mrb[0].mxu0 %v370
  %v448 = vpop.f32.mrb[0].mxu0
  %v449 = vadd.f32 %v376, %v448
  %v450 = vpop.f32.mrb[0].mxu0
  %451 = vdwg.mxu0
  %v452 = vmax.f32 %v444, 0.0
  %v453 = vmax.f32 %v449, 0.0
  %454 = vmatprep.subr.mxu0 %v170
  %455 = vmatpush1.msra.mxu0 %v169
  %456 = vmatprep.subr.mxu0 %v172
  %457 = vmatpush1.msra.mxu0 %v171
  %458 = vmatprep.subr.mxu0 %v174
  %459 = vmatpush1.msra.mxu0 %v173
  %460 = vmatprep.subr.mxu0 %v176
  %461 = vmatpush1.msra.mxu0 %v175
  %462 = vmatprep.subr.mxu0 %v178
  %463 = vmatpush1.msra.mxu0 %v177
  %464 = vmatprep.subr.mxu0 %v180
  %465 = vmatpush1.msra.mxu0 %v179
  %466 = vmatprep.subr.mxu0 %v182
  %467 = vmatpush1.msra.mxu0 %v181
  %468 = vmatprep.subr.mxu0 %v184
  %469 = vmatpush1.msra.mxu0 %v183
  %470 = vmatprep.subr.mxu0 %v186
  %471 = vmatpush1.msra.mxu0 %v185
  %472 = vmatprep.subr.mxu0 %v188
  %473 = vmatpush1.msra.mxu0 %v187
  %474 = vmatprep.subr.mxu0 %v190
  %475 = vmatpush1.msra.mxu0 %v189
  %476 = vmatprep.subr.mxu0 %v192
  %477 = vmatpush1.msra.mxu0 %v191
  %478 = vmatprep.subr.mxu0 %v194
  %479 = vmatpush1.msra.mxu0 %v193
  %480 = vmatprep.subr.mxu0 %v196
  %481 = vmatpush1.msra.mxu0 %v195
  %482 = vmatprep.subr.mxu0 %v198
  %483 = vmatpush1.msra.mxu0 %v197
  %484 = vmatprep.subr.mxu0 %v200
  %485 = vmatpush1.msra.mxu0 %v199
  %486 = vmatprep.subr.mxu0 0.0
  %487 = vmatpush1.msra.mxu0 0.0
  %488 = vmatprep.subr.mxu0 0.0
  %489 = vmatpush1.msra.mxu0 0.0
  %490 = vmatprep.subr.mxu0 0.0
  %491 = vmatpush1.msra.mxu0 0.0
  %492 = vmatprep.subr.mxu0 0.0
  %493 = vmatpush1.msra.mxu0 0.0
  %494 = vmatprep.subr.mxu0 0.0
  %495 = vmatpush1.msra.mxu0 0.0
  %496 = vmatprep.subr.mxu0 0.0
  %497 = vmatpush1.msra.mxu0 0.0
  %498 = vmatprep.subr.mxu0 0.0
  %499 = vmatpush1.msra.mxu0 0.0
  %500 = vmatprep.subr.mxu0 0.0
  %501 = vmatpush1.msra.mxu0 0.0
  %502 = vmatprep.subr.mxu0 0.0
  %503 = vmatpush1.msra.mxu0 0.0
  %504 = vmatprep.subr.mxu0 0.0
  %505 = vmatpush1.msra.mxu0 0.0
  %506 = vmatprep.subr.mxu0 0.0
  %507 = vmatpush1.msra.mxu0 0.0
  %508 = vmatprep.subr.mxu0 0.0
  %509 = vmatpush1.msra.mxu0 0.0
  %510 = vmatprep.subr.mxu0 0.0
  %511 = vmatpush1.msra.mxu0 0.0
  %512 = vmatprep.subr.mxu0 0.0
  %513 = vmatpush1.msra.mxu0 0.0
  %514 = vmatprep.subr.mxu0 0.0
  %515 = vmatpush1.msra.mxu0 0.0
  %516 = vmatprep.subr.mxu0 0.0
  %517 = vmatpush1.msra.mxu0 0.0
  %518 = vmatprep.mubr.f32.mxu0 0.0
  %519 = vmatmul.mubr.f32.gmra.mrb[0].mxu0 %v452
  %v520 = vpop.f32.mrb[0].mxu0
  %v521 = vadd.f32 0.0, %v520
  %v522 = vpop.f32.mrb[0].mxu0
  %v523 = vadd.f32 0.0, %v522
  %524 = vmatprep.mubr.f32.mxu0 0.0
  %525 = vmatmul.mubr.f32.gmra.mrb[0].mxu0 %v453
  %v526 = vpop.f32.mrb[0].mxu0
  %v527 = vadd.f32 0.0, %v526
  %v528 = vpop.f32.mrb[0].mxu0
  %v529 = vadd.f32 0.0, %v528
  %530 = vdwg.mxu0
  %v532 = vsel %vm291, %v98, 0
  %v535 = vsel %vm291, %v99, 0
  %v538 = vsel %vm291, %v100, 0
  %v541 = vsel %vm291, %v101, 0
  %543 = vmatprep.subr.mxu0 0.0
  %544 = vmatpush1.msra.mxu0 %v521
  %545 = vmatprep.subr.mxu0 0.0
  %546 = vmatpush1.msra.mxu0 %v527
  %547 = vmatprep.subr.mxu0 0.0
  %548 = vmatpush1.msra.mxu0 %v523
  %549 = vmatprep.subr.mxu0 0.0
  %550 = vmatpush1.msra.mxu0 %v529
  %551 = vmatprep.subr.mxu0 0.0
  %552 = vmatpush1.msra.mxu0 0.0
  %553 = vmatprep.subr.mxu0 0.0
  %554 = vmatpush1.msra.mxu0 0.0
  %555 = vmatprep.subr.mxu0 0.0
  %556 = vmatpush1.msra.mxu0 0.0
  %557 = vmatprep.subr.mxu0 0.0
  %558 = vmatpush1.msra.mxu0 0.0
  %559 = vmatprep.subr.mxu0 0.0
  %560 = vmatpush1.msra.mxu0 0.0
  %561 = vmatprep.subr.mxu0 0.0
  %562 = vmatpush1.msra.mxu0 0.0
  %563 = vmatprep.subr.mxu0 0.0
  %564 = vmatpush1.msra.mxu0 0.0
  %565 = vmatprep.subr.mxu0 0.0
  %566 = vmatpush1.msra.mxu0 0.0
  %567 = vmatprep.subr.mxu0 0.0
  %568 = vmatpush1.msra.mxu0 0.0
  %569 = vmatprep.subr.mxu0 0.0
  %570 = vmatpush1.msra.mxu0 0.0
  %571 = vmatprep.subr.mxu0 0.0
  %572 = vmatpush1.msra.mxu0 0.0
  %573 = vmatprep.subr.mxu0 0.0
  %574 = vmatpush1.msra.mxu0 0.0
  %575 = vmatprep.subr.mxu0 0.0
  %576 = vmatpush1.msra.mxu0 0.0
  %577 = vmatprep.subr.mxu0 0.0
  %578 = vmatpush1.msra.mxu0 0.0
  %579 = vmatprep.subr.mxu0 0.0
  %580 = vmatpush1.msra.mxu0 0.0
  %581 = vmatprep.subr.mxu0 0.0
  %582 = vmatpush1.msra.mxu0 0.0
  %583 = vmatprep.subr.mxu0 0.0
  %584 = vmatpush1.msra.mxu0 0.0
  %585 = vmatprep.subr.mxu0 0.0
  %586 = vmatpush1.msra.mxu0 0.0
  %587 = vmatprep.subr.mxu0 0.0
  %588 = vmatpush1.msra.mxu0 0.0
  %589 = vmatprep.subr.mxu0 0.0
  %590 = vmatpush1.msra.mxu0 0.0
  %591 = vmatprep.subr.mxu0 0.0
  %592 = vmatpush1.msra.mxu0 0.0
  %593 = vmatprep.subr.mxu0 0.0
  %594 = vmatpush1.msra.mxu0 0.0
  %595 = vmatprep.subr.mxu0 0.0
  %596 = vmatpush1.msra.mxu0 0.0
  %597 = vmatprep.subr.mxu0 0.0
  %598 = vmatpush1.msra.mxu0 0.0
  %599 = vmatprep.subr.mxu0 0.0
  %600 = vmatpush1.msra.mxu0 0.0
  %601 = vmatprep.subr.mxu0 0.0
  %602 = vmatpush1.msra.mxu0 0.0
  %603 = vmatprep.subr.mxu0 0.0
  %604 = vmatpush1.msra.mxu0 0.0
  %605 = vmatprep.subr.mxu0 0.0
  %606 = vmatpush1.msra.mxu0 0.0
  %607 = vmatprep.mubr.f32.mxu0 0.0
  %608 = vmatmul.mubr.f32.gmra.mrb[0].mxu0 %v532
  %v609 = vpop.f32.mrb[0].mxu0
  %v610 = vadd.f32 0.0, %v609
  %v611 = vpop.f32.mrb[0].mxu0
  %612 = vmatprep.mubr.f32.mxu0 0.0
  %613 = vmatmul.mubr.f32.gmra.mrb[0].mxu0 %v535
  %v614 = vpop.f32.mrb[0].mxu0
  %v615 = vadd.f32 0.0, %v614
  %v616 = vpop.f32.mrb[0].mxu0
  %617 = vmatprep.mubr.f32.mxu0 0.0
  %618 = vmatmul.mubr.f32.gmra.mrb[0].mxu0 %v538
  %v619 = vpop.f32.mrb[0].mxu0
  %v620 = vadd.f32 0.0, %v619
  %v621 = vpop.f32.mrb[0].mxu0
  %622 = vmatprep.mubr.f32.mxu0 0.0
  %623 = vmatmul.mubr.f32.gmra.mrb[0].mxu0 %v541
  %v624 = vpop.f32.mrb[0].mxu0
  %v625 = vadd.f32 0.0, %v624
  %v626 = vpop.f32.mrb[0].mxu0
  %627 = vdwg.mxu0
  %628 = vmatprep.subr.mxu0 0.0
  %629 = vmatpush1.msra.mxu0 %v136
  %630 = vmatprep.subr.mxu0 0.0
  %631 = vmatpush1.msra.mxu0 %v137
  %632 = vmatprep.subr.mxu0 0.0
  %633 = vmatpush1.msra.mxu0 %v138
  %634 = vmatprep.subr.mxu0 0.0
  %635 = vmatpush1.msra.mxu0 %v139
  %636 = vmatprep.subr.mxu0 0.0
  %637 = vmatpush1.msra.mxu0 %v140
  %638 = vmatprep.subr.mxu0 0.0
  %639 = vmatpush1.msra.mxu0 %v141
  %640 = vmatprep.subr.mxu0 0.0
  %641 = vmatpush1.msra.mxu0 %v142
  %642 = vmatprep.subr.mxu0 0.0
  %643 = vmatpush1.msra.mxu0 %v143
  %644 = vmatprep.subr.mxu0 0.0
  %645 = vmatpush1.msra.mxu0 %v144
  %646 = vmatprep.subr.mxu0 0.0
  %647 = vmatpush1.msra.mxu0 %v145
  %648 = vmatprep.subr.mxu0 0.0
  %649 = vmatpush1.msra.mxu0 %v146
  %650 = vmatprep.subr.mxu0 0.0
  %651 = vmatpush1.msra.mxu0 %v147
  %652 = vmatprep.subr.mxu0 0.0
  %653 = vmatpush1.msra.mxu0 %v148
  %654 = vmatprep.subr.mxu0 0.0
  %655 = vmatpush1.msra.mxu0 %v149
  %656 = vmatprep.subr.mxu0 0.0
  %657 = vmatpush1.msra.mxu0 %v150
  %658 = vmatprep.subr.mxu0 0.0
  %659 = vmatpush1.msra.mxu0 %v151
  %660 = vmatprep.subr.mxu0 0.0
  %661 = vmatpush1.msra.mxu0 0.0
  %662 = vmatprep.subr.mxu0 0.0
  %663 = vmatpush1.msra.mxu0 0.0
  %664 = vmatprep.subr.mxu0 0.0
  %665 = vmatpush1.msra.mxu0 0.0
  %666 = vmatprep.subr.mxu0 0.0
  %667 = vmatpush1.msra.mxu0 0.0
  %668 = vmatprep.subr.mxu0 0.0
  %669 = vmatpush1.msra.mxu0 0.0
  %670 = vmatprep.subr.mxu0 0.0
  %671 = vmatpush1.msra.mxu0 0.0
  %672 = vmatprep.subr.mxu0 0.0
  %673 = vmatpush1.msra.mxu0 0.0
  %674 = vmatprep.subr.mxu0 0.0
  %675 = vmatpush1.msra.mxu0 0.0
  %676 = vmatprep.subr.mxu0 0.0
  %677 = vmatpush1.msra.mxu0 0.0
  %678 = vmatprep.subr.mxu0 0.0
  %679 = vmatpush1.msra.mxu0 0.0
  %680 = vmatprep.subr.mxu0 0.0
  %681 = vmatpush1.msra.mxu0 0.0
  %682 = vmatprep.subr.mxu0 0.0
  %683 = vmatpush1.msra.mxu0 0.0
  %684 = vmatprep.subr.mxu0 0.0
  %685 = vmatpush1.msra.mxu0 0.0
  %686 = vmatprep.subr.mxu0 0.0
  %687 = vmatpush1.msra.mxu0 0.0
  %688 = vmatprep.subr.mxu0 0.0
  %689 = vmatpush1.msra.mxu0 0.0
  %690 = vmatprep.subr.mxu0 0.0
  %691 = vmatpush1.msra.mxu0 0.0
  %692 = vmatprep.mubr.f32.mxu0 0.0
  %693 = vmatmul.mubr.f32.gmra.mrb[0].mxu0 %v273
  %v694 = vpop.f32.mrb[0].mxu0
  %v695 = vadd.f32 %v610, %v694
  %v696 = vpop.f32.mrb[0].mxu0
  %697 = vmatprep.mubr.f32.mxu0 0.0
  %698 = vmatmul.mubr.f32.gmra.mrb[0].mxu0 %v278
  %v699 = vpop.f32.mrb[0].mxu0
  %v700 = vadd.f32 %v615, %v699
  %v701 = vpop.f32.mrb[0].mxu0
  %702 = vmatprep.mubr.f32.mxu0 0.0
  %703 = vmatmul.mubr.f32.gmra.mrb[0].mxu0 %v283
  %v704 = vpop.f32.mrb[0].mxu0
  %v705 = vadd.f32 %v620, %v704
  %v706 = vpop.f32.mrb[0].mxu0
  %707 = vmatprep.mubr.f32.mxu0 0.0
  %708 = vmatmul.mubr.f32.gmra.mrb[0].mxu0 %v288
  %v709 = vpop.f32.mrb[0].mxu0
  %v710 = vadd.f32 %v625, %v709
  %v711 = vpop.f32.mrb[0].mxu0
  %712 = vdwg.mxu0
  %v713 = vlaneseq
  %v714 = vshrl.u32 %v713, 7
  %v715 = vsub.s32 2, %v714
  %v716 = vrot.slane %v201, %v715
  %v717 = vadd.f32 %v695, %v716
  %v718 = vadd.f32 %v700, %v716
  %v719 = vadd.f32 %v705, %v716
  %v720 = vadd.f32 %v710, %v716
  %v721 = vmax.f32 %v717, 0.0
  %v722 = vmax.f32 %v718, 0.0
  %v723 = vmax.f32 %v719, 0.0
  %v724 = vmax.f32 %v720, 0.0
  %726 = vset.pattern.permute.xlu0 127
  %727 = vperm.xlu0 %726, %v23
  %v728 = vpop.permute.xlu0 %727
  %731 = vset.pattern.permute.xlu0 127
  %732 = vperm.xlu0 %731, %v24
  %v733 = vpop.permute.xlu0 %732
  %736 = vset.pattern.permute.xlu0 127
  %737 = vperm.xlu0 %736, %v25
  %v738 = vpop.permute.xlu0 %737
  %741 = vset.pattern.permute.xlu0 127
  %742 = vperm.xlu0 %741, %v26
  %v743 = vpop.permute.xlu0 %742
  %v745 = vmul.f32 %v721, %v728
  %v746 = vmul.f32 %v722, %v733
  %v747 = vmul.f32 %v723, %v738
  %v748 = vmul.f32 %v724, %v743
  %v750 = vsel %vm291, %v51, 0
  %752 = vmatprep.subr.mxu0 0.0
  %753 = vmatpush1.msra.mxu0 %v745
  %754 = vmatprep.subr.mxu0 0.0
  %755 = vmatpush1.msra.mxu0 %v746
  %756 = vmatprep.subr.mxu0 0.0
  %757 = vmatpush1.msra.mxu0 %v747
  %758 = vmatprep.subr.mxu0 0.0
  %759 = vmatpush1.msra.mxu0 %v748
  %760 = vmatprep.subr.mxu0 0.0
  %761 = vmatpush1.msra.mxu0 0.0
  %762 = vmatprep.subr.mxu0 0.0
  %763 = vmatpush1.msra.mxu0 0.0
  %764 = vmatprep.subr.mxu0 0.0
  %765 = vmatpush1.msra.mxu0 0.0
  %766 = vmatprep.subr.mxu0 0.0
  %767 = vmatpush1.msra.mxu0 0.0
  %768 = vmatprep.subr.mxu0 0.0
  %769 = vmatpush1.msra.mxu0 0.0
  %770 = vmatprep.subr.mxu0 0.0
  %771 = vmatpush1.msra.mxu0 0.0
  %772 = vmatprep.subr.mxu0 0.0
  %773 = vmatpush1.msra.mxu0 0.0
  %774 = vmatprep.subr.mxu0 0.0
  %775 = vmatpush1.msra.mxu0 0.0
  %776 = vmatprep.subr.mxu0 0.0
  %777 = vmatpush1.msra.mxu0 0.0
  %778 = vmatprep.subr.mxu0 0.0
  %779 = vmatpush1.msra.mxu0 0.0
  %780 = vmatprep.subr.mxu0 0.0
  %781 = vmatpush1.msra.mxu0 0.0
  %782 = vmatprep.subr.mxu0 0.0
  %783 = vmatpush1.msra.mxu0 0.0
  %784 = vmatprep.subr.mxu0 0.0
  %785 = vmatpush1.msra.mxu0 0.0
  %786 = vmatprep.subr.mxu0 0.0
  %787 = vmatpush1.msra.mxu0 0.0
  %788 = vmatprep.subr.mxu0 0.0
  %789 = vmatpush1.msra.mxu0 0.0
  %790 = vmatprep.subr.mxu0 0.0
  %791 = vmatpush1.msra.mxu0 0.0
  %792 = vmatprep.subr.mxu0 0.0
  %793 = vmatpush1.msra.mxu0 0.0
  %794 = vmatprep.subr.mxu0 0.0
  %795 = vmatpush1.msra.mxu0 0.0
  %796 = vmatprep.subr.mxu0 0.0
  %797 = vmatpush1.msra.mxu0 0.0
  %798 = vmatprep.subr.mxu0 0.0
  %799 = vmatpush1.msra.mxu0 0.0
  %800 = vmatprep.subr.mxu0 0.0
  %801 = vmatpush1.msra.mxu0 0.0
  %802 = vmatprep.subr.mxu0 0.0
  %803 = vmatpush1.msra.mxu0 0.0
  %804 = vmatprep.subr.mxu0 0.0
  %805 = vmatpush1.msra.mxu0 0.0
  %806 = vmatprep.subr.mxu0 0.0
  %807 = vmatpush1.msra.mxu0 0.0
  %808 = vmatprep.subr.mxu0 0.0
  %809 = vmatpush1.msra.mxu0 0.0
  %810 = vmatprep.subr.mxu0 0.0
  %811 = vmatpush1.msra.mxu0 0.0
  %812 = vmatprep.subr.mxu0 0.0
  %813 = vmatpush1.msra.mxu0 0.0
  %814 = vmatprep.subr.mxu0 0.0
  %815 = vmatpush1.msra.mxu0 0.0
  %816 = vmatprep.mubr.f32.mxu0 0.0
  %817 = vmatmul.mubr.f32.gmra.mrb[0].mxu0 %v750
  %v818 = vpop.f32.mrb[0].mxu0
  %v819 = vadd.f32 0.0, %v818
  %v820 = vpop.f32.mrb[0].mxu0
  %821 = vdwg.mxu0
  %v822 = vlaneseq
  %v823 = vshrl.u32 %v822, 7
  %v824 = vsub.s32 3, %v823
  %v825 = vrot.slane %v201, %v824
  %826 = vmatprep.subr.mxu0 0.0
  %827 = vmatpush1.msra.mxu0 %v153
  %828 = vmatprep.subr.mxu0 0.0
  %829 = vmatpush1.msra.mxu0 %v154
  %830 = vmatprep.subr.mxu0 0.0
  %831 = vmatpush1.msra.mxu0 %v155
  %832 = vmatprep.subr.mxu0 0.0
  %833 = vmatpush1.msra.mxu0 %v156
  %834 = vmatprep.subr.mxu0 0.0
  %835 = vmatpush1.msra.mxu0 %v157
  %836 = vmatprep.subr.mxu0 0.0
  %837 = vmatpush1.msra.mxu0 %v158
  %838 = vmatprep.subr.mxu0 0.0
  %839 = vmatpush1.msra.mxu0 %v159
  %840 = vmatprep.subr.mxu0 0.0
  %841 = vmatpush1.msra.mxu0 %v160
  %842 = vmatprep.subr.mxu0 0.0
  %843 = vmatpush1.msra.mxu0 %v161
  %844 = vmatprep.subr.mxu0 0.0
  %845 = vmatpush1.msra.mxu0 %v162
  %846 = vmatprep.subr.mxu0 0.0
  %847 = vmatpush1.msra.mxu0 %v163
  %848 = vmatprep.subr.mxu0 0.0
  %849 = vmatpush1.msra.mxu0 %v164
  %850 = vmatprep.subr.mxu0 0.0
  %851 = vmatpush1.msra.mxu0 %v165
  %852 = vmatprep.subr.mxu0 0.0
  %853 = vmatpush1.msra.mxu0 %v166
  %854 = vmatprep.subr.mxu0 0.0
  %855 = vmatpush1.msra.mxu0 %v167
  %856 = vmatprep.subr.mxu0 0.0
  %857 = vmatpush1.msra.mxu0 %v168
  %858 = vmatprep.subr.mxu0 0.0
  %859 = vmatpush1.msra.mxu0 0.0
  %860 = vmatprep.subr.mxu0 0.0
  %861 = vmatpush1.msra.mxu0 0.0
  %862 = vmatprep.subr.mxu0 0.0
  %863 = vmatpush1.msra.mxu0 0.0
  %864 = vmatprep.subr.mxu0 0.0
  %865 = vmatpush1.msra.mxu0 0.0
  %866 = vmatprep.subr.mxu0 0.0
  %867 = vmatpush1.msra.mxu0 0.0
  %868 = vmatprep.subr.mxu0 0.0
  %869 = vmatpush1.msra.mxu0 0.0
  %870 = vmatprep.subr.mxu0 0.0
  %871 = vmatpush1.msra.mxu0 0.0
  %872 = vmatprep.subr.mxu0 0.0
  %873 = vmatpush1.msra.mxu0 0.0
  %874 = vmatprep.subr.mxu0 0.0
  %875 = vmatpush1.msra.mxu0 0.0
  %876 = vmatprep.subr.mxu0 0.0
  %877 = vmatpush1.msra.mxu0 0.0
  %878 = vmatprep.subr.mxu0 0.0
  %879 = vmatpush1.msra.mxu0 0.0
  %880 = vmatprep.subr.mxu0 0.0
  %881 = vmatpush1.msra.mxu0 0.0
  %882 = vmatprep.subr.mxu0 0.0
  %883 = vmatpush1.msra.mxu0 0.0
  %884 = vmatprep.subr.mxu0 0.0
  %885 = vmatpush1.msra.mxu0 0.0
  %886 = vmatprep.subr.mxu0 0.0
  %887 = vmatpush1.msra.mxu0 0.0
  %888 = vmatprep.subr.mxu0 0.0
  %889 = vmatpush1.msra.mxu0 0.0
  %890 = vmatprep.mubr.f32.mxu0 0.0
  %891 = vmatmul.mubr.f32.gmra.mrb[0].mxu0 %v819
  %v892 = vpop.f32.mrb[0].mxu0
  %v893 = vadd.f32 %v825, %v892
  %v894 = vpop.f32.mrb[0].mxu0
  %895 = vdwg.mxu0
  %v896 = vxor.u32 %v893, 2147483648
  %v897 = vmul.f32 %v896, 1.442695
  %v898 = vpow.pop %v897
  %v899 = vadd.f32 %v898, 1.0
  %v900 = vrcp.pop %v899
  %v901 = vmul.f32 1.0, %v900
  %902 = vst [vmem:[%s6] sm:$0xff] %v901
  // Predicated region
  $region26: #{dtsp_forward_pallas.1} parent=0 // pred_check
    _
  $region27: #{dtsp_forward_pallas.1} parent=0 // pred_check_branch
    %904 = sbr.rel (0) target = $region29
  $region28: #{dtsp_forward_pallas.1} parent=0 // pred_region
    _
  $region29: #{dtsp_forward_pallas.1} parent=0 // pred_fallthru
    _
  // Predicated region
  $region30: #{dtsp_forward_pallas.1} parent=0 // pred_check
    _
  $region31: #{dtsp_forward_pallas.1} parent=0 // pred_check_branch
    %906 = sbr.rel (0) target = $region33
  $region32: #{dtsp_forward_pallas.1} parent=0 // pred_region
    _
  $region33: #{dtsp_forward_pallas.1} parent=0 // pred_fallthru
    _

</llo_original>
